<compile_context>
chip_gen: v7x
topology: tpu7x:2x2x1
jax: 0.10.0
libtpu: 0.0.40
codegen_flags: <defaults>
</compile_context>

<pallas_src>
import math

import jax
import jax.numpy as jnp
import numpy as np
from jax.experimental import pallas as pl
from jax.experimental.pallas import tpu as pltpu

NUM_EMBEDDINGS = 32                            # E
SEQ_LEN = 8                                    # T (tokens per batch stream)
NUM_HEADS = 8                                  # H
DIM_PER_HEAD = NUM_EMBEDDINGS // NUM_HEADS     # D = 4
LANES = 128                                    # lane-dense padding width
NEG_MASK = -1e30                               # finite mask value; exp underflows to exactly 0


def _mha_kernel(x_ref, wqkv_ref, bqkv_ref, bias_ref, kmask_ref, vmask_ref,
                wo_ref, bo_ref, o_ref):
    """Single grid step: whole folded batch, all heads, all projections."""
    hd = NUM_HEADS * DIM_PER_HEAD                         # 32 packed lanes per Q/K/V group

    x = x_ref[...]                                        # (BT, E) = (16, 32)

    # --- fused lane-dense Q/K/V projection: one MXU push, 128-wide unmasked result ---
    qkv = jnp.dot(x, wqkv_ref[...],
                  preferred_element_type=jnp.float32) + bqkv_ref[...]   # (BT, 128)

    # Three aligned 32-lane slices (head-major (h, d) inside each group; scale pre-folded).
    q = qkv[:, 0:hd]                                      # (BT, 32)
    k = qkv[:, hd:2 * hd]                                 # (BT, 32)
    v = qkv[:, 2 * hd:3 * hd]                             # (BT, 32)

    # --- scores for ALL heads as one lane-dense slab -------------------------------------
    # Block-diagonal K^T: (32, H*BT); column group h holds head h's K^T, elsewhere zero.
    k_bd = jnp.tile(k.T, (1, NUM_HEADS)) * kmask_ref[...]
    # Single (16,32)@(32,128) matmul + precomputed additive causal/batch mask.
    s = jnp.dot(q, k_bd, preferred_element_type=jnp.float32) + bias_ref[...]   # (BT, H*BT)

    # --- one dense softmax numerator ------------------------------------------------------
    # Row max is constant within every head's 16-lane segment -> exact for softmax (shift
    # invariance); masked (-1e30) lanes underflow to exactly 0.
    m = jnp.max(s, axis=-1, keepdims=True)
    p = jnp.exp(s - m)                                    # (BT, H*BT)

    # --- P @ V directly in head-merged (BT, E) layout ------------------------------------
    vmask = vmask_ref[...]                                # (H*BT, 32) constant 0/1 block-diag
    v_bd = jnp.tile(v, (NUM_HEADS, 1)) * vmask            # block-diagonal V
    o_un = jnp.dot(p, v_bd, preferred_element_type=jnp.float32)    # (BT, 32) unnormalized
    # Per-head denominators, broadcast over each head's D columns by the same block mask.
    denom = jnp.dot(p, vmask, preferred_element_type=jnp.float32)  # (BT, 32)
    heads = o_un / denom                                  # exact division (off critical path)

    # --- output projection, lane-dense 128-wide (columns >= E zero-padded) ---------------
    out = jnp.dot(heads, wo_ref[...], preferred_element_type=jnp.float32) + bo_ref[...]
    o_ref[...] = out.astype(o_ref.dtype)


def _mask_constants(bt):
    """Trace-time numpy constants: additive causal/batch bias and block-diagonal masks."""
    hd = NUM_HEADS * DIM_PER_HEAD
    idx = np.arange(bt)
    # Same folded batch element AND causal.
    valid = (idx[:, None] // SEQ_LEN == idx[None, :] // SEQ_LEN) & (idx[:, None] >= idx[None, :])
    bias = np.tile(np.where(valid, 0.0, NEG_MASK).astype(np.float32),
                   (1, NUM_HEADS))                                     # (BT, H*BT)
    e_idx = np.arange(hd)                                              # h*D + d
    l_idx = np.arange(NUM_HEADS * bt)                                  # h*BT + s
    kmask = (e_idx[:, None] // DIM_PER_HEAD == l_idx[None, :] // bt).astype(np.float32)
    vmask = np.ascontiguousarray(kmask.T)                              # (H*BT, 32)
    return bias, kmask, vmask


@jax.jit
def multi_attention(x, w_qkv, b_qkv, w_o, b_o):
    b, t, e = x.shape
    bt = b * t
    hd = NUM_HEADS * DIM_PER_HEAD
    x2d = x.reshape(bt, e)                               # fold batch into rows
    bias, kmask, vmask = _mask_constants(bt)
    full = lambda i: (0, 0)
    out_pad = pl.pallas_call(
        _mha_kernel,
        out_shape=jax.ShapeDtypeStruct((bt, LANES), jnp.float32),
        grid_spec=pltpu.PrefetchScalarGridSpec(
            num_scalar_prefetch=0,
            grid=(1,),                                   # single step: problem is overhead-bound
            in_specs=[
                pl.BlockSpec((bt, e), full),             # x (batch folded)
                pl.BlockSpec((e, LANES), full),          # fused [Wq|Wk|Wv], 3x 32-lane groups
                pl.BlockSpec((1, LANES), full),          # fused q/k/v biases
                pl.BlockSpec((bt, NUM_HEADS * bt), full),      # additive causal/batch mask
                pl.BlockSpec((hd, NUM_HEADS * bt), full),      # K block-diagonal 0/1 mask
                pl.BlockSpec((NUM_HEADS * bt, hd), full),      # V block-diagonal 0/1 mask
                pl.BlockSpec((e, LANES), full),          # Wo^T zero-padded to 128 lanes
                pl.BlockSpec((1, LANES), full),          # bo zero-padded
            ],
            out_specs=pl.BlockSpec((bt, LANES), full),   # lane-dense unmasked output slab
        ),
        compiler_params=pltpu.CompilerParams(
            dimension_semantics=("arbitrary",)),
    )(x2d, w_qkv, b_qkv, jnp.asarray(bias), jnp.asarray(kmask), jnp.asarray(vmask),
      w_o, b_o)
    return out_pad[:, :e].reshape(b, t, e)


def pack_params(wq, bq, wk, bk, wv, bv, wo_t, bo):
    """One-time packing into the kernel's fused, lane-aligned, padded layout."""
    scale = 1.0 / math.sqrt(DIM_PER_HEAD)
    hd = NUM_HEADS * DIM_PER_HEAD                        # 32

    def headmajor(w):                                    # (H, E, D) -> (E, H*D)
        return jnp.transpose(w, (1, 0, 2)).reshape(NUM_EMBEDDINGS, hd)

    # Q lanes 0:32 (scale folded in), K lanes 32:64, V lanes 64:96, zeros 96:128.
    w_qkv = jnp.concatenate(
        [headmajor(wq) * scale, headmajor(wk), headmajor(wv),
         jnp.zeros((NUM_EMBEDDINGS, LANES - 3 * hd), jnp.float32)], axis=1)
    b_qkv = jnp.concatenate(
        [bq.reshape(hd) * scale, bk.reshape(hd), bv.reshape(hd),
         jnp.zeros((LANES - 3 * hd,), jnp.float32)]).reshape(1, LANES)
    w_o = jnp.pad(wo_t, ((0, 0), (0, LANES - NUM_EMBEDDINGS)))
    b_o = jnp.pad(bo.reshape(1, NUM_EMBEDDINGS), ((0, 0), (0, LANES - NUM_EMBEDDINGS)))
    return w_qkv, b_qkv, w_o, b_o


def _reference(x, wq, bq, wk, bk, wv, bv, wo_t, bo):
    """Pure-JAX mirror of the PyTorch MultiAttention module."""
    t = x.shape[1]
    mask = jnp.tril(jnp.ones((t, t), jnp.float32)) == 0   # True where masked
    outs = []
    for h in range(NUM_HEADS):
        q = x @ wq[h] + bq[h]
        k = x @ wk[h] + bk[h]
        v = x @ wv[h] + bv[h]
        s = q @ jnp.swapaxes(k, 1, 2) / math.sqrt(DIM_PER_HEAD)
        s = jnp.where(mask, -jnp.inf, s)
        p = jax.nn.softmax(s, axis=2)
        outs.append(p @ v)
    return jnp.concatenate(outs, axis=2) @ wo_t + bo


if __name__ == "__main__":
    key = jax.random.PRNGKey(0)
    keys = jax.random.split(key, 9)

    B, T, E, H, D = 2, SEQ_LEN, NUM_EMBEDDINGS, NUM_HEADS, DIM_PER_HEAD

    def uinit(k, shape, fan_in):
        bound = 1.0 / np.sqrt(fan_in)
        return jax.random.uniform(k, shape, jnp.float32, -bound, bound)

    x = jax.random.normal(keys[0], (B, T, E), dtype=jnp.float32)

    # Per-head q/k/v Linear(E -> D) params, stored transposed (y = x @ w + b), nn.Linear-like init.
    wq = uinit(keys[1], (H, E, D), E); bq = uinit(keys[2], (H, D), E)
    wk = uinit(keys[3], (H, E, D), E); bk = uinit(keys[4], (H, D), E)
    wv = uinit(keys[5], (H, E, D), E); bv = uinit(keys[6], (H, D), E)
    # Final Linear(E -> E), stored transposed.
    wo_t = uinit(keys[7], (E, E), E)
    bo = uinit(keys[8], (E,), E)

    w_qkv, b_qkv, w_o, b_o = pack_params(wq, bq, wk, bk, wv, bv, wo_t, bo)

    out = multi_attention(x, w_qkv, b_qkv, w_o, b_o)
    out = jax.block_until_ready(out)

    ref = _reference(x, wq, bq, wk, bk, wv, bv, wo_t, bo)
    # Exact softmax division in-kernel -> tight tolerance (per perf review).
    np.testing.assert_allclose(np.asarray(out), np.asarray(ref), rtol=1e-5, atol=1e-5)
    print("KERNEL_OK")
</pallas_src>

<mosaic_0001>
module attributes {stable_mosaic.version = 11 : i64} {
  func.func @_mha_kernel(%arg0: i32, %arg1: memref<16x32xf32, #tpu.memory_space<vmem>>, %arg2: memref<32x128xf32, #tpu.memory_space<vmem>>, %arg3: memref<1x128xf32, #tpu.memory_space<vmem>>, %arg4: memref<16x128xf32, #tpu.memory_space<vmem>>, %arg5: memref<32x128xf32, #tpu.memory_space<vmem>>, %arg6: memref<128x32xf32, #tpu.memory_space<vmem>>, %arg7: memref<32x128xf32, #tpu.memory_space<vmem>>, %arg8: memref<1x128xf32, #tpu.memory_space<vmem>>, %arg9: memref<16x128xf32, #tpu.memory_space<vmem>>) attributes {dimension_semantics = [#tpu.dimension_semantics<arbitrary>], iteration_bounds = array<i64: 1>, scalar_prefetch = 0 : i64, scratch_operands = 0 : i64, tpu.core_type = #tpu.core_type<tc>, window_params = [{pipeline_mode = #tpu.pipeline_mode<synchronous>, transform_indices = @transform_0, window_bounds = array<i64: 16, 32>}, {pipeline_mode = #tpu.pipeline_mode<synchronous>, transform_indices = @transform_1, window_bounds = array<i64: 32, 128>}, {pipeline_mode = #tpu.pipeline_mode<synchronous>, transform_indices = @transform_2, window_bounds = array<i64: 1, 128>}, {pipeline_mode = #tpu.pipeline_mode<synchronous>, transform_indices = @transform_3, window_bounds = array<i64: 16, 128>}, {pipeline_mode = #tpu.pipeline_mode<synchronous>, transform_indices = @transform_4, window_bounds = array<i64: 32, 128>}, {pipeline_mode = #tpu.pipeline_mode<synchronous>, transform_indices = @transform_5, window_bounds = array<i64: 128, 32>}, {pipeline_mode = #tpu.pipeline_mode<synchronous>, transform_indices = @transform_6, window_bounds = array<i64: 32, 128>}, {pipeline_mode = #tpu.pipeline_mode<synchronous>, transform_indices = @transform_7, window_bounds = array<i64: 1, 128>}, {pipeline_mode = #tpu.pipeline_mode<synchronous>, transform_indices = @transform_8, window_bounds = array<i64: 16, 128>}]} {
    %c0 = arith.constant 0 : index
    %c0_0 = arith.constant 0 : index
    %0 = vector.load %arg1[%c0, %c0_0] : memref<16x32xf32, #tpu.memory_space<vmem>>, vector<16x32xf32>
    %c0_1 = arith.constant 0 : index
    %c0_2 = arith.constant 0 : index
    %1 = vector.load %arg2[%c0_1, %c0_2] : memref<32x128xf32, #tpu.memory_space<vmem>>, vector<32x128xf32>
    %cst = arith.constant dense<0.000000e+00> : vector<16x128xf32>
    %2 = tpu.matmul %0, %1, %cst {dimension_numbers = #tpu.dot_dimension_numbers<[1], [0], [0], [1], [0, 0, 1, 1], [], []>} : vector<16x32xf32>, vector<32x128xf32>, vector<16x128xf32> -> vector<16x128xf32>
    %c0_3 = arith.constant 0 : index
    %c0_4 = arith.constant 0 : index
    %3 = vector.load %arg3[%c0_3, %c0_4] : memref<1x128xf32, #tpu.memory_space<vmem>>, vector<1x128xf32>
    %4 = vector.broadcast %3 : vector<1x128xf32> to vector<16x128xf32>
    %5 = arith.addf %2, %4 : vector<16x128xf32>
    %6 = vector.extract_strided_slice %5 {offsets = [0, 0], sizes = [16, 32], strides = [1, 1]} : vector<16x128xf32> to vector<16x32xf32>
    %7 = vector.extract_strided_slice %5 {offsets = [0, 32], sizes = [16, 32], strides = [1, 1]} : vector<16x128xf32> to vector<16x32xf32>
    %8 = vector.extract_strided_slice %5 {offsets = [0, 64], sizes = [16, 32], strides = [1, 1]} : vector<16x128xf32> to vector<16x32xf32>
    %9 = tpu.transpose %7, [1, 0] : vector<16x32xf32> -> vector<32x16xf32>
    %10 = tpu.concatenate %9, %9, %9, %9, %9, %9, %9, %9 in 1 : vector<32x16xf32>, vector<32x16xf32>, vector<32x16xf32>, vector<32x16xf32>, vector<32x16xf32>, vector<32x16xf32>, vector<32x16xf32>, vector<32x16xf32> -> vector<32x128xf32>
    %c0_5 = arith.constant 0 : index
    %c0_6 = arith.constant 0 : index
    %11 = vector.load %arg5[%c0_5, %c0_6] : memref<32x128xf32, #tpu.memory_space<vmem>>, vector<32x128xf32>
    %12 = arith.mulf %10, %11 : vector<32x128xf32>
    %cst_7 = arith.constant dense<0.000000e+00> : vector<16x128xf32>
    %13 = tpu.matmul %6, %12, %cst_7 {dimension_numbers = #tpu.dot_dimension_numbers<[1], [0], [0], [1], [0, 0, 1, 1], [], []>} : vector<16x32xf32>, vector<32x128xf32>, vector<16x128xf32> -> vector<16x128xf32>
    %c0_8 = arith.constant 0 : index
    %c0_9 = arith.constant 0 : index
    %14 = vector.load %arg4[%c0_8, %c0_9] : memref<16x128xf32, #tpu.memory_space<vmem>>, vector<16x128xf32>
    %15 = arith.addf %13, %14 : vector<16x128xf32>
    %cst_10 = arith.constant dense<0xFF800000> : vector<16xf32>
    %16 = vector.multi_reduction <maximumf>, %15, %cst_10 [1] : vector<16x128xf32> to vector<16xf32>
    %17 = vector.shape_cast %16 : vector<16xf32> to vector<16x1xf32>
    %18 = vector.broadcast %17 : vector<16x1xf32> to vector<16x128xf32>
    %19 = arith.subf %15, %18 : vector<16x128xf32>
    %20 = math.exp %19 : vector<16x128xf32>
    %c0_11 = arith.constant 0 : index
    %c0_12 = arith.constant 0 : index
    %21 = vector.load %arg6[%c0_11, %c0_12] : memref<128x32xf32, #tpu.memory_space<vmem>>, vector<128x32xf32>
    %22 = tpu.concatenate %8, %8, %8, %8, %8, %8, %8, %8 in 0 : vector<16x32xf32>, vector<16x32xf32>, vector<16x32xf32>, vector<16x32xf32>, vector<16x32xf32>, vector<16x32xf32>, vector<16x32xf32>, vector<16x32xf32> -> vector<128x32xf32>
    %23 = arith.mulf %22, %21 : vector<128x32xf32>
    %cst_13 = arith.constant dense<0.000000e+00> : vector<16x32xf32>
    %24 = tpu.matmul %20, %23, %cst_13 {dimension_numbers = #tpu.dot_dimension_numbers<[1], [0], [0], [1], [0, 0, 1, 1], [], []>} : vector<16x128xf32>, vector<128x32xf32>, vector<16x32xf32> -> vector<16x32xf32>
    %cst_14 = arith.constant dense<0.000000e+00> : vector<16x32xf32>
    %25 = tpu.matmul %20, %21, %cst_14 {dimension_numbers = #tpu.dot_dimension_numbers<[1], [0], [0], [1], [0, 0, 1, 1], [], []>} : vector<16x128xf32>, vector<128x32xf32>, vector<16x32xf32> -> vector<16x32xf32>
    %26 = arith.divf %24, %25 : vector<16x32xf32>
    %c0_15 = arith.constant 0 : index
    %c0_16 = arith.constant 0 : index
    %27 = vector.load %arg7[%c0_15, %c0_16] : memref<32x128xf32, #tpu.memory_space<vmem>>, vector<32x128xf32>
    %cst_17 = arith.constant dense<0.000000e+00> : vector<16x128xf32>
    %28 = tpu.matmul %26, %27, %cst_17 {dimension_numbers = #tpu.dot_dimension_numbers<[1], [0], [0], [1], [0, 0, 1, 1], [], []>} : vector<16x32xf32>, vector<32x128xf32>, vector<16x128xf32> -> vector<16x128xf32>
    %c0_18 = arith.constant 0 : index
    %c0_19 = arith.constant 0 : index
    %29 = vector.load %arg8[%c0_18, %c0_19] : memref<1x128xf32, #tpu.memory_space<vmem>>, vector<1x128xf32>
    %30 = vector.broadcast %29 : vector<1x128xf32> to vector<16x128xf32>
    %31 = arith.addf %28, %30 : vector<16x128xf32>
    %c0_20 = arith.constant 0 : index
    %c0_21 = arith.constant 0 : index
    %32 = vector.load %arg9[%c0_20, %c0_21] : memref<16x128xf32, #tpu.memory_space<vmem>>, vector<16x128xf32>
    tpu.vector_store %arg9[%c0_20, %c0_21], %31 {strides = array<i32>} : memref<16x128xf32, #tpu.memory_space<vmem>>, vector<16x128xf32>,
    return
  }
  func.func @transform_0(%arg0: i32) -> (i32, i32) {
    %c0_i32 = arith.constant 0 : i32
    %c0_i32_0 = arith.constant 0 : i32
    %c0_i32_1 = arith.constant 0 : i32
    return %c0_i32, %c0_i32_0 : i32, i32
  }
  func.func @transform_1(%arg0: i32) -> (i32, i32) {
    %c0_i32 = arith.constant 0 : i32
    %c0_i32_0 = arith.constant 0 : i32
    %c0_i32_1 = arith.constant 0 : i32
    return %c0_i32, %c0_i32_0 : i32, i32
  }
  func.func @transform_2(%arg0: i32) -> (i32, i32) {
    %c0_i32 = arith.constant 0 : i32
    %c0_i32_0 = arith.constant 0 : i32
    %c0_i32_1 = arith.constant 0 : i32
    return %c0_i32, %c0_i32_0 : i32, i32
  }
  func.func @transform_3(%arg0: i32) -> (i32, i32) {
    %c0_i32 = arith.constant 0 : i32
    %c0_i32_0 = arith.constant 0 : i32
    %c0_i32_1 = arith.constant 0 : i32
    return %c0_i32, %c0_i32_0 : i32, i32
  }
  func.func @transform_4(%arg0: i32) -> (i32, i32) {
    %c0_i32 = arith.constant 0 : i32
    %c0_i32_0 = arith.constant 0 : i32
    %c0_i32_1 = arith.constant 0 : i32
    return %c0_i32, %c0_i32_0 : i32, i32
  }
  func.func @transform_5(%arg0: i32) -> (i32, i32) {
    %c0_i32 = arith.constant 0 : i32
    %c0_i32_0 = arith.constant 0 : i32
    %c0_i32_1 = arith.constant 0 : i32
    return %c0_i32, %c0_i32_0 : i32, i32
  }
  func.func @transform_6(%arg0: i32) -> (i32, i32) {
    %c0_i32 = arith.constant 0 : i32
    %c0_i32_0 = arith.constant 0 : i32
    %c0_i32_1 = arith.constant 0 : i32
    return %c0_i32, %c0_i32_0 : i32, i32
  }
  func.func @transform_7(%arg0: i32) -> (i32, i32) {
    %c0_i32 = arith.constant 0 : i32
    %c0_i32_0 = arith.constant 0 : i32
    %c0_i32_1 = arith.constant 0 : i32
    return %c0_i32, %c0_i32_0 : i32, i32
  }
  func.func @transform_8(%arg0: i32) -> (i32, i32) {
    %c0_i32 = arith.constant 0 : i32
    %c0_i32_0 = arith.constant 0 : i32
    %c0_i32_1 = arith.constant 0 : i32
    return %c0_i32, %c0_i32_0 : i32, i32
  }
}

</mosaic_0001>

<llo_original>
// kernel: multi_attention.1
$region0: #{multi_attention.1}
  #allocation0 [shape = 'u32[]', space=smem, size = 0x4, offset = 0x4, fixed_abs, tag = 'smem constant byte address 0x4 - core index']
  #allocation1 [shape = 'u32[144,128]{1,0:T(1,128)}', space=vmem, size = 0x12000, scoped, tag = 'internal scratch']
  %s0 = inlined_call_operand.hbm [shape: f32[16,32], index: 0, kind: input, shape index: {}]
  %s1 = inlined_call_operand.hbm [shape: f32[32,128], index: 1, kind: input, shape index: {}]
  %s2 = inlined_call_operand.vmem [shape: f32[1,128], index: 2, kind: input, shape index: {}]
  %s3 = inlined_call_operand.vmem [shape: f32[16,128], index: 3, kind: input, shape index: {}]
  %s4 = inlined_call_operand.hbm [shape: f32[32,128], index: 4, kind: input, shape index: {}]
  %s5 = inlined_call_operand.hbm [shape: f32[128,32], index: 5, kind: input, shape index: {}]
  %s6 = inlined_call_operand.hbm [shape: f32[32,128], index: 6, kind: input, shape index: {}]
  %s7 = inlined_call_operand.vmem [shape: f32[1,128], index: 7, kind: input, shape index: {}]
  %s8 = inlined_call_operand.vmem [shape: f32[16,128], index: 8, kind: output, shape index: {}]
  %s9 = sld [smem:[#allocation0]]
  $region62: #{multi_attention.1} parent=0
    _
  %s11 = ssub.s32 1, %s9
  %s12 = scalar_select 0, %s11, %s9
  $region1: #{multi_attention.1} parent=0
    #allocation2 [shape = 'u8[8192]{0}', space=vmem, size = 0x2000, scoped, tag = 'input window, operand 0, single buffered']
    #allocation3 [shape = 's32[1]{0}', space=sflag, size = 0x4, scoped, tag = 'scoped memory for multi_attention.1']
    #allocation4 [shape = 'u8[16384]{0}', space=vmem, size = 0x4000, scoped, tag = 'input window, operand 1, single buffered']
    #allocation5 [shape = 's32[1]{0}', space=sflag, size = 0x4, scoped, tag = 'scoped memory for multi_attention.1']
    #allocation6 [shape = 'u8[16384]{0}', space=vmem, size = 0x4000, scoped, tag = 'input window, operand 4, single buffered']
    #allocation7 [shape = 'u8[65536]{0}', space=vmem, size = 0x10000, scoped, tag = 'input window, operand 5, single buffered']
    #allocation8 [shape = 's32[1]{0}', space=sflag, size = 0x4, scoped, tag = 'scoped memory for multi_attention.1']
    #allocation9 [shape = 'u8[16384]{0}', space=vmem, size = 0x4000, scoped, tag = 'input window, operand 6, single buffered']
    %13 = vsyncpa [#allocation3], 0
    %14 = vsyncpa [#allocation5], 0
    %15 = vsyncpa [#allocation8], 0
    // Predicated region
    $region2: #{multi_attention.1} parent=1 // pred_check
      _
    $region3: #{multi_attention.1} parent=1 // pred_check_branch
      %17 = sbr.rel (0) target = $region5
    $region4: #{multi_attention.1} parent=1 // pred_region
      %s19 = ssub.s32 256, 256
      %20 = vsyncadd [#allocation3], %s19
      %s21 = sshll.u32 [#allocation2], 4
      %s22 = int_to_ptr.vmem [resolvable:$true] %s21
      %27 = dma.hbm_to_vmem [thread:$0]  %s0, 256, %s22, [#allocation3], 128, 128, 8
    $region5: #{multi_attention.1} parent=1 // pred_fallthru
      _
    // Predicated region
    $region6: #{multi_attention.1} parent=1 // pred_check
      _
    $region7: #{multi_attention.1} parent=1 // pred_check_branch
      %29 = sbr.rel (0) target = $region9
    $region8: #{multi_attention.1} parent=1 // pred_region
      %s31 = ssub.s32 512, 512
      %32 = vsyncadd [#allocation5], %s31
      %s33 = sshll.u32 [#allocation4], 4
      %s34 = int_to_ptr.vmem [resolvable:$true] %s33
      %39 = dma.hbm_to_vmem [thread:$0]  %s1, 512, %s34, [#allocation5], 128, 128, 8
    $region9: #{multi_attention.1} parent=1 // pred_fallthru
      _
    // Predicated region
    $region10: #{multi_attention.1} parent=1 // pred_check
      _
    $region11: #{multi_attention.1} parent=1 // pred_check_branch
      %41 = sbr.rel (0) target = $region13
    $region12: #{multi_attention.1} parent=1 // pred_region
      _
    $region13: #{multi_attention.1} parent=1 // pred_fallthru
      _
    // Predicated region
    $region14: #{multi_attention.1} parent=1 // pred_check
      _
    $region15: #{multi_attention.1} parent=1 // pred_check_branch
      %43 = sbr.rel (0) target = $region17
    $region16: #{multi_attention.1} parent=1 // pred_region
      _
    $region17: #{multi_attention.1} parent=1 // pred_fallthru
      _
    // Predicated region
    $region18: #{multi_attention.1} parent=1 // pred_check
      _
    $region19: #{multi_attention.1} parent=1 // pred_check_branch
      %45 = sbr.rel (0) target = $region21
    $region20: #{multi_attention.1} parent=1 // pred_region
      %s47 = ssub.s32 512, 512
      %48 = vsyncadd [#allocation5], %s47
      %s49 = sshll.u32 [#allocation6], 4
      %s50 = int_to_ptr.vmem [resolvable:$true] %s49
      %55 = dma.hbm_to_vmem [thread:$0]  %s4, 512, %s50, [#allocation5], 128, 128, 8
    $region21: #{multi_attention.1} parent=1 // pred_fallthru
      _
    // Predicated region
    $region22: #{multi_attention.1} parent=1 // pred_check
      _
    $region23: #{multi_attention.1} parent=1 // pred_check_branch
      %57 = sbr.rel (0) target = $region25
    $region24: #{multi_attention.1} parent=1 // pred_region
      %s59 = ssub.s32 2048, 2048
      %60 = vsyncadd [#allocation8], %s59
      %s61 = sshll.u32 [#allocation7], 4
      %s62 = int_to_ptr.vmem [resolvable:$true] %s61
      %67 = dma.hbm_to_vmem [thread:$0]  %s5, 2048, %s62, [#allocation8], 128, 128, 8
    $region25: #{multi_attention.1} parent=1 // pred_fallthru
      _
    // Predicated region
    $region26: #{multi_attention.1} parent=1 // pred_check
      _
    $region27: #{multi_attention.1} parent=1 // pred_check_branch
      %69 = sbr.rel (0) target = $region29
    $region28: #{multi_attention.1} parent=1 // pred_region
      %s71 = ssub.s32 512, 512
      %72 = vsyncadd [#allocation8], %s71
      %s73 = sshll.u32 [#allocation9], 4
      %s74 = int_to_ptr.vmem [resolvable:$true] %s73
      %79 = dma.hbm_to_vmem [thread:$0]  %s6, 512, %s74, [#allocation8], 128, 128, 8
    $region29: #{multi_attention.1} parent=1 // pred_fallthru
      _
    // Predicated region
    $region30: #{multi_attention.1} parent=1 // pred_check
      _
    $region31: #{multi_attention.1} parent=1 // pred_check_branch
      %81 = sbr.rel (0) target = $region33
    $region32: #{multi_attention.1} parent=1 // pred_region
      _
    $region33: #{multi_attention.1} parent=1 // pred_fallthru
      _
    // Predicated region
    $region34: #{multi_attention.1} parent=1 // pred_check
      _
    $region35: #{multi_attention.1} parent=1 // pred_check_branch
      %83 = sbr.rel (0) target = $region37
    $region36: #{multi_attention.1} parent=1 // pred_region
      %84 = dma.done [#allocation3], 256
    $region37: #{multi_attention.1} parent=1 // pred_fallthru
      _
    // Predicated region
    $region38: #{multi_attention.1} parent=1 // pred_check
      _
    $region39: #{multi_attention.1} parent=1 // pred_check_branch
      %86 = sbr.rel (0) target = $region41
    $region40: #{multi_attention.1} parent=1 // pred_region
      %87 = dma.done [#allocation5], 512
    $region41: #{multi_attention.1} parent=1 // pred_fallthru
      _
    // Predicated region
    $region42: #{multi_attention.1} parent=1 // pred_check
      _
    $region43: #{multi_attention.1} parent=1 // pred_check_branch
      %89 = sbr.rel (0) target = $region45
    $region44: #{multi_attention.1} parent=1 // pred_region
      %90 = dma.done [#allocation5], 512
    $region45: #{multi_attention.1} parent=1 // pred_fallthru
      _
    // Predicated region
    $region46: #{multi_attention.1} parent=1 // pred_check
      _
    $region47: #{multi_attention.1} parent=1 // pred_check_branch
      %92 = sbr.rel (0) target = $region49
    $region48: #{multi_attention.1} parent=1 // pred_region
      %93 = dma.done [#allocation8], 2048
    $region49: #{multi_attention.1} parent=1 // pred_fallthru
      _
    // Predicated region
    $region50: #{multi_attention.1} parent=1 // pred_check
      _
    $region51: #{multi_attention.1} parent=1 // pred_check_branch
      %95 = sbr.rel (0) target = $region53
    $region52: #{multi_attention.1} parent=1 // pred_region
      %96 = dma.done [#allocation8], 512
    $region53: #{multi_attention.1} parent=1 // pred_fallthru
      _
    %v97 = vld [vmem:[#allocation2] sm:$0xff]
    %v98 = vld [vmem:[#allocation2 + $0x8] sm:$0xff]
    %v99 = vld [vmem:[#allocation4] sm:$0xff]
    %v100 = vld [vmem:[#allocation4 + $0x8] sm:$0xff]
    %v101 = vld [vmem:[#allocation4 + $0x10] sm:$0xff]
    %v102 = vld [vmem:[#allocation4 + $0x18] sm:$0xff]
    %v103 = vld [vmem:[%s2] sm:$0x1]
    %v105 = vlaneseq
    %v106 = vshrl.u32 %v105, 7
    %v107 = vsub.s32 0, %v106
    %v108 = vrot.slane %v103, %v107
    %vm110 = vcmask 261120
    %v112 = vsel %vm110, %v97, 0
    %v115 = vsel %vm110, %v98, 0
    %117 = vmatprep.subr.mxu0 0.0
    %118 = vmatpush1.msra.mxu0 %v99
    %119 = vmatprep.subr.mxu0 0.0
    %120 = vmatpush1.msra.mxu0 %v100
    %121 = vmatprep.subr.mxu0 0.0
    %122 = vmatpush1.msra.mxu0 %v101
    %123 = vmatprep.subr.mxu0 0.0
    %124 = vmatpush1.msra.mxu0 %v102
    %125 = vmatprep.subr.mxu0 0.0
    %126 = vmatpush1.msra.mxu0 0.0
    %127 = vmatprep.subr.mxu0 0.0
    %128 = vmatpush1.msra.mxu0 0.0
    %129 = vmatprep.subr.mxu0 0.0
    %130 = vmatpush1.msra.mxu0 0.0
    %131 = vmatprep.subr.mxu0 0.0
    %132 = vmatpush1.msra.mxu0 0.0
    %133 = vmatprep.subr.mxu0 0.0
    %134 = vmatpush1.msra.mxu0 0.0
    %135 = vmatprep.subr.mxu0 0.0
    %136 = vmatpush1.msra.mxu0 0.0
    %137 = vmatprep.subr.mxu0 0.0
    %138 = vmatpush1.msra.mxu0 0.0
    %139 = vmatprep.subr.mxu0 0.0
    %140 = vmatpush1.msra.mxu0 0.0
    %141 = vmatprep.subr.mxu0 0.0
    %142 = vmatpush1.msra.mxu0 0.0
    %143 = vmatprep.subr.mxu0 0.0
    %144 = vmatpush1.msra.mxu0 0.0
    %145 = vmatprep.subr.mxu0 0.0
    %146 = vmatpush1.msra.mxu0 0.0
    %147 = vmatprep.subr.mxu0 0.0
    %148 = vmatpush1.msra.mxu0 0.0
    %149 = vmatprep.subr.mxu0 0.0
    %150 = vmatpush1.msra.mxu0 0.0
    %151 = vmatprep.subr.mxu0 0.0
    %152 = vmatpush1.msra.mxu0 0.0
    %153 = vmatprep.subr.mxu0 0.0
    %154 = vmatpush1.msra.mxu0 0.0
    %155 = vmatprep.subr.mxu0 0.0
    %156 = vmatpush1.msra.mxu0 0.0
    %157 = vmatprep.subr.mxu0 0.0
    %158 = vmatpush1.msra.mxu0 0.0
    %159 = vmatprep.subr.mxu0 0.0
    %160 = vmatpush1.msra.mxu0 0.0
    %161 = vmatprep.subr.mxu0 0.0
    %162 = vmatpush1.msra.mxu0 0.0
    %163 = vmatprep.subr.mxu0 0.0
    %164 = vmatpush1.msra.mxu0 0.0
    %165 = vmatprep.subr.mxu0 0.0
    %166 = vmatpush1.msra.mxu0 0.0
    %167 = vmatprep.subr.mxu0 0.0
    %168 = vmatpush1.msra.mxu0 0.0
    %169 = vmatprep.subr.mxu0 0.0
    %170 = vmatpush1.msra.mxu0 0.0
    %171 = vmatprep.subr.mxu0 0.0
    %172 = vmatpush1.msra.mxu0 0.0
    %173 = vmatprep.subr.mxu0 0.0
    %174 = vmatpush1.msra.mxu0 0.0
    %175 = vmatprep.subr.mxu0 0.0
    %176 = vmatpush1.msra.mxu0 0.0
    %177 = vmatprep.subr.mxu0 0.0
    %178 = vmatpush1.msra.mxu0 0.0
    %179 = vmatprep.subr.mxu0 0.0
    %180 = vmatpush1.msra.mxu0 0.0
    %181 = vmatprep.mubr.f32.mxu0 0.0
    %182 = vmatmul.mubr.f32.gmra.mrb[0].mxu0 %v112
    %v183 = vpop.f32.mrb[0].mxu0
    %v184 = vadd.f32 %v108, %v183
    %v185 = vpop.f32.mrb[0].mxu0
    %186 = vmatprep.mubr.f32.mxu0 0.0
    %187 = vmatmul.mubr.f32.gmra.mrb[0].mxu0 %v115
    %v188 = vpop.f32.mrb[0].mxu0
    %v189 = vadd.f32 %v108, %v188
    %v190 = vpop.f32.mrb[0].mxu0
    %191 = vdwg.mxu0
    %194 = vrot.lane.b32.xlu0 %v184, 96
    %v195 = vpop.permute.xlu0 %194
    %196 = vrot.lane.b32.xlu0 %v189, 96
    %v197 = vpop.permute.xlu0 %196
    %200 = vxpose.xlu0.b32.start [1/16] %v195, 128
    %201 = vxpose.xlu0.b32.cont [2/16] %v197, 128
    %202 = vxpose.xlu0.b32.cont [3/16] 0.0, 128
    %203 = vxpose.xlu0.b32.cont [4/16] 0.0, 128
    %204 = vxpose.xlu0.b32.cont [5/16] 0.0, 128
    %205 = vxpose.xlu0.b32.cont [6/16] 0.0, 128
    %206 = vxpose.xlu0.b32.cont [7/16] 0.0, 128
    %207 = vxpose.xlu0.b32.cont [8/16] 0.0, 128
    %208 = vxpose.xlu0.b32.cont [9/16] 0.0, 128
    %209 = vxpose.xlu0.b32.cont [10/16] 0.0, 128
    %210 = vxpose.xlu0.b32.cont [11/16] 0.0, 128
    %211 = vxpose.xlu0.b32.cont [12/16] 0.0, 128
    %212 = vxpose.xlu0.b32.cont [13/16] 0.0, 128
    %213 = vxpose.xlu0.b32.cont [14/16] 0.0, 128
    %214 = vxpose.xlu0.b32.cont [15/16] 0.0, 128
    %215 = vxpose.xlu0.b32.end [16/16] 0.0, 128
    %v216 = vpop.trf.xlu0
    %v217 = vpop.trf.xlu0
    %v218 = vpop.trf.xlu0
    %v219 = vpop.trf.xlu0
    %v220 = vpop.trf.xlu0
    %v221 = vpop.trf.xlu0
    %v222 = vpop.trf.xlu0
    %v223 = vpop.trf.xlu0
    %v224 = vpop.trf.xlu0
    %v225 = vpop.trf.xlu0
    %v226 = vpop.trf.xlu0
    %v227 = vpop.trf.xlu0
    %v228 = vpop.trf.xlu0
    %v229 = vpop.trf.xlu0
    %v230 = vpop.trf.xlu0
    %v231 = vpop.trf.xlu0
    %236 = vrot.lane.b32.xlu0 %v216, 16
    %v237 = vpop.permute.xlu0 %236
    %238 = vrot.lane.b32.xlu0 %v217, 16
    %v239 = vpop.permute.xlu0 %238
    %240 = vrot.lane.b32.xlu0 %v218, 16
    %v241 = vpop.permute.xlu0 %240
    %242 = vrot.lane.b32.xlu0 %v219, 16
    %v243 = vpop.permute.xlu0 %242
    %248 = vrot.lane.b32.xlu0 %v216, 32
    %v249 = vpop.permute.xlu0 %248
    %250 = vrot.lane.b32.xlu0 %v217, 32
    %v251 = vpop.permute.xlu0 %250
    %252 = vrot.lane.b32.xlu0 %v218, 32
    %v253 = vpop.permute.xlu0 %252
    %254 = vrot.lane.b32.xlu0 %v219, 32
    %v255 = vpop.permute.xlu0 %254
    %260 = vrot.lane.b32.xlu0 %v216, 48
    %v261 = vpop.permute.xlu0 %260
    %262 = vrot.lane.b32.xlu0 %v217, 48
    %v263 = vpop.permute.xlu0 %262
    %264 = vrot.lane.b32.xlu0 %v218, 48
    %v265 = vpop.permute.xlu0 %264
    %266 = vrot.lane.b32.xlu0 %v219, 48
    %v267 = vpop.permute.xlu0 %266
    %272 = vrot.lane.b32.xlu0 %v216, 64
    %v273 = vpop.permute.xlu0 %272
    %274 = vrot.lane.b32.xlu0 %v217, 64
    %v275 = vpop.permute.xlu0 %274
    %276 = vrot.lane.b32.xlu0 %v218, 64
    %v277 = vpop.permute.xlu0 %276
    %278 = vrot.lane.b32.xlu0 %v219, 64
    %v279 = vpop.permute.xlu0 %278
    %284 = vrot.lane.b32.xlu0 %v216, 80
    %v285 = vpop.permute.xlu0 %284
    %286 = vrot.lane.b32.xlu0 %v217, 80
    %v287 = vpop.permute.xlu0 %286
    %288 = vrot.lane.b32.xlu0 %v218, 80
    %v289 = vpop.permute.xlu0 %288
    %290 = vrot.lane.b32.xlu0 %v219, 80
    %v291 = vpop.permute.xlu0 %290
    %296 = vrot.lane.b32.xlu0 %v216, 96
    %v297 = vpop.permute.xlu0 %296
    %298 = vrot.lane.b32.xlu0 %v217, 96
    %v299 = vpop.permute.xlu0 %298
    %300 = vrot.lane.b32.xlu0 %v218, 96
    %v301 = vpop.permute.xlu0 %300
    %302 = vrot.lane.b32.xlu0 %v219, 96
    %v303 = vpop.permute.xlu0 %302
    %308 = vrot.lane.b32.xlu0 %v216, 112
    %v309 = vpop.permute.xlu0 %308
    %310 = vrot.lane.b32.xlu0 %v217, 112
    %v311 = vpop.permute.xlu0 %310
    %312 = vrot.lane.b32.xlu0 %v218, 112
    %v313 = vpop.permute.xlu0 %312
    %314 = vrot.lane.b32.xlu0 %v219, 112
    %v315 = vpop.permute.xlu0 %314
    %vm320 = vcmask 130048
    %v321 = vsel %vm320, %v216, %v237
    %v322 = vsel %vm320, %v217, %v239
    %v323 = vsel %vm320, %v218, %v241
    %v324 = vsel %vm320, %v219, %v243
    %v325 = vsel %vm110, %v321, %v249
    %v326 = vsel %vm110, %v322, %v251
    %v327 = vsel %vm110, %v323, %v253
    %v328 = vsel %vm110, %v324, %v255
    %vm329 = vcmask 392192
    %v330 = vsel %vm329, %v325, %v261
    %v331 = vsel %vm329, %v326, %v263
    %v332 = vsel %vm329, %v327, %v265
    %v333 = vsel %vm329, %v328, %v267
    %vm334 = vcmask 523264
    %v335 = vsel %vm334, %v330, %v273
    %v336 = vsel %vm334, %v331, %v275
    %v337 = vsel %vm334, %v332, %v277
    %v338 = vsel %vm334, %v333, %v279
    %vm339 = vcmask 654336
    %v340 = vsel %vm339, %v335, %v285
    %v341 = vsel %vm339, %v336, %v287
    %v342 = vsel %vm339, %v337, %v289
    %v343 = vsel %vm339, %v338, %v291
    %vm344 = vcmask 785408
    %v345 = vsel %vm344, %v340, %v297
    %v346 = vsel %vm344, %v341, %v299
    %v347 = vsel %vm344, %v342, %v301
    %v348 = vsel %vm344, %v343, %v303
    %vm349 = vcmask 916480
    %v350 = vsel %vm349, %v345, %v309
    %v351 = vsel %vm349, %v346, %v311
    %v352 = vsel %vm349, %v347, %v313
    %v353 = vsel %vm349, %v348, %v315
    %v354 = vld [vmem:[#allocation6] sm:$0xff]
    %v355 = vld [vmem:[#allocation6 + $0x8] sm:$0xff]
    %v356 = vld [vmem:[#allocation6 + $0x10] sm:$0xff]
    %v357 = vld [vmem:[#allocation6 + $0x18] sm:$0xff]
    %v358 = vmul.f32 %v350, %v354
    %v359 = vmul.f32 %v351, %v355
    %v360 = vmul.f32 %v352, %v356
    %v361 = vmul.f32 %v353, %v357
    %v362 = vld [vmem:[%s3] sm:$0xff]
    %v363 = vld [vmem:[%s3 + $0x8] sm:$0xff]
    %v364 = vsel %vm110, %v184, 0
    %v366 = vsel %vm110, %v189, 0
    %368 = vmatprep.subr.mxu0 0.0
    %369 = vmatpush1.msra.mxu0 %v358
    %370 = vmatprep.subr.mxu0 0.0
    %371 = vmatpush1.msra.mxu0 %v359
    %372 = vmatprep.subr.mxu0 0.0
    %373 = vmatpush1.msra.mxu0 %v360
    %374 = vmatprep.subr.mxu0 0.0
    %375 = vmatpush1.msra.mxu0 %v361
    %376 = vmatprep.subr.mxu0 0.0
    %377 = vmatpush1.msra.mxu0 0.0
    %378 = vmatprep.subr.mxu0 0.0
    %379 = vmatpush1.msra.mxu0 0.0
    %380 = vmatprep.subr.mxu0 0.0
    %381 = vmatpush1.msra.mxu0 0.0
    %382 = vmatprep.subr.mxu0 0.0
    %383 = vmatpush1.msra.mxu0 0.0
    %384 = vmatprep.subr.mxu0 0.0
    %385 = vmatpush1.msra.mxu0 0.0
    %386 = vmatprep.subr.mxu0 0.0
    %387 = vmatpush1.msra.mxu0 0.0
    %388 = vmatprep.subr.mxu0 0.0
    %389 = vmatpush1.msra.mxu0 0.0
    %390 = vmatprep.subr.mxu0 0.0
    %391 = vmatpush1.msra.mxu0 0.0
    %392 = vmatprep.subr.mxu0 0.0
    %393 = vmatpush1.msra.mxu0 0.0
    %394 = vmatprep.subr.mxu0 0.0
    %395 = vmatpush1.msra.mxu0 0.0
    %396 = vmatprep.subr.mxu0 0.0
    %397 = vmatpush1.msra.mxu0 0.0
    %398 = vmatprep.subr.mxu0 0.0
    %399 = vmatpush1.msra.mxu0 0.0
    %400 = vmatprep.subr.mxu0 0.0
    %401 = vmatpush1.msra.mxu0 0.0
    %402 = vmatprep.subr.mxu0 0.0
    %403 = vmatpush1.msra.mxu0 0.0
    %404 = vmatprep.subr.mxu0 0.0
    %405 = vmatpush1.msra.mxu0 0.0
    %406 = vmatprep.subr.mxu0 0.0
    %407 = vmatpush1.msra.mxu0 0.0
    %408 = vmatprep.subr.mxu0 0.0
    %409 = vmatpush1.msra.mxu0 0.0
    %410 = vmatprep.subr.mxu0 0.0
    %411 = vmatpush1.msra.mxu0 0.0
    %412 = vmatprep.subr.mxu0 0.0
    %413 = vmatpush1.msra.mxu0 0.0
    %414 = vmatprep.subr.mxu0 0.0
    %415 = vmatpush1.msra.mxu0 0.0
    %416 = vmatprep.subr.mxu0 0.0
    %417 = vmatpush1.msra.mxu0 0.0
    %418 = vmatprep.subr.mxu0 0.0
    %419 = vmatpush1.msra.mxu0 0.0
    %420 = vmatprep.subr.mxu0 0.0
    %421 = vmatpush1.msra.mxu0 0.0
    %422 = vmatprep.subr.mxu0 0.0
    %423 = vmatpush1.msra.mxu0 0.0
    %424 = vmatprep.subr.mxu0 0.0
    %425 = vmatpush1.msra.mxu0 0.0
    %426 = vmatprep.subr.mxu0 0.0
    %427 = vmatpush1.msra.mxu0 0.0
    %428 = vmatprep.subr.mxu0 0.0
    %429 = vmatpush1.msra.mxu0 0.0
    %430 = vmatprep.subr.mxu0 0.0
    %431 = vmatpush1.msra.mxu0 0.0
    %432 = vmatprep.mubr.f32.mxu0 0.0
    %433 = vmatmul.mubr.f32.gmra.mrb[0].mxu0 %v364
    %v434 = vpop.f32.mrb[0].mxu0
    %v435 = vadd.f32 %v362, %v434
    %v436 = vpop.f32.mrb[0].mxu0
    %437 = vmatprep.mubr.f32.mxu0 0.0
    %438 = vmatmul.mubr.f32.gmra.mrb[0].mxu0 %v366
    %v439 = vpop.f32.mrb[0].mxu0
    %v440 = vadd.f32 %v363, %v439
    %v441 = vpop.f32.mrb[0].mxu0
    %442 = vdwg.mxu0
    %443 = vmax.xlane.f32.xlu0 %v435
    %v444 = vpop.xlane.xlu0 %443
    %445 = vmax.xlane.f32.xlu0 %v440
    %v446 = vpop.xlane.xlu0 %445
    %v447 = vsub.f32 %v435, %v444
    %v448 = vsub.f32 %v440, %v446
    %v449 = vmul.f32 %v447, 1.442695
    %v450 = vpow.pop %v449
    %v451 = vmul.f32 %v448, 1.442695
    %v452 = vpow.pop %v451
    %v453 = vld [vmem:[#allocation7] sm:$0xff]
    %v454 = vld [vmem:[#allocation7 + $0x8] sm:$0xff]
    %v455 = vld [vmem:[#allocation7 + $0x10] sm:$0xff]
    %v456 = vld [vmem:[#allocation7 + $0x18] sm:$0xff]
    %v457 = vld [vmem:[#allocation7 + $0x20] sm:$0xff]
    %v458 = vld [vmem:[#allocation7 + $0x28] sm:$0xff]
    %v459 = vld [vmem:[#allocation7 + $0x30] sm:$0xff]
    %v460 = vld [vmem:[#allocation7 + $0x38] sm:$0xff]
    %v461 = vld [vmem:[#allocation7 + $0x40] sm:$0xff]
    %v462 = vld [vmem:[#allocation7 + $0x48] sm:$0xff]
    %v463 = vld [vmem:[#allocation7 + $0x50] sm:$0xff]
    %v464 = vld [vmem:[#allocation7 + $0x58] sm:$0xff]
    %v465 = vld [vmem:[#allocation7 + $0x60] sm:$0xff]
    %v466 = vld [vmem:[#allocation7 + $0x68] sm:$0xff]
    %v467 = vld [vmem:[#allocation7 + $0x70] sm:$0xff]
    %v468 = vld [vmem:[#allocation7 + $0x78] sm:$0xff]
    %485 = vrot.lane.b32.xlu0 %v453, 64
    %v486 = vpop.permute.xlu0 %485
    %487 = vrot.lane.b32.xlu0 %v454, 64
    %v488 = vpop.permute.xlu0 %487
    %489 = vrot.lane.b32.xlu0 %v455, 64
    %v490 = vpop.permute.xlu0 %489
    %491 = vrot.lane.b32.xlu0 %v456, 64
    %v492 = vpop.permute.xlu0 %491
    %493 = vrot.lane.b32.xlu0 %v457, 64
    %v494 = vpop.permute.xlu0 %493
    %495 = vrot.lane.b32.xlu0 %v458, 64
    %v496 = vpop.permute.xlu0 %495
    %497 = vrot.lane.b32.xlu0 %v459, 64
    %v498 = vpop.permute.xlu0 %497
    %499 = vrot.lane.b32.xlu0 %v460, 64
    %v500 = vpop.permute.xlu0 %499
    %501 = vrot.lane.b32.xlu0 %v461, 64
    %v502 = vpop.permute.xlu0 %501
    %503 = vrot.lane.b32.xlu0 %v462, 64
    %v504 = vpop.permute.xlu0 %503
    %505 = vrot.lane.b32.xlu0 %v463, 64
    %v506 = vpop.permute.xlu0 %505
    %507 = vrot.lane.b32.xlu0 %v464, 64
    %v508 = vpop.permute.xlu0 %507
    %509 = vrot.lane.b32.xlu0 %v465, 64
    %v510 = vpop.permute.xlu0 %509
    %511 = vrot.lane.b32.xlu0 %v466, 64
    %v512 = vpop.permute.xlu0 %511
    %513 = vrot.lane.b32.xlu0 %v467, 64
    %v514 = vpop.permute.xlu0 %513
    %515 = vrot.lane.b32.xlu0 %v468, 64
    %v516 = vpop.permute.xlu0 %515
    %v533 = vmul.f32 %v184, %v486
    %v534 = vmul.f32 %v189, %v488
    %v535 = vmul.f32 %v184, %v490
    %v536 = vmul.f32 %v189, %v492
    %v537 = vmul.f32 %v184, %v494
    %v538 = vmul.f32 %v189, %v496
    %v539 = vmul.f32 %v184, %v498
    %v540 = vmul.f32 %v189, %v500
    %v541 = vmul.f32 %v184, %v502
    %v542 = vmul.f32 %v189, %v504
    %v543 = vmul.f32 %v184, %v506
    %v544 = vmul.f32 %v189, %v508
    %v545 = vmul.f32 %v184, %v510
    %v546 = vmul.f32 %v189, %v512
    %v547 = vmul.f32 %v184, %v514
    %v548 = vmul.f32 %v189, %v516
    %565 = vrot.lane.b32.xlu0 %v533, 64
    %v566 = vpop.permute.xlu0 %565
    %567 = vrot.lane.b32.xlu0 %v534, 64
    %v568 = vpop.permute.xlu0 %567
    %569 = vrot.lane.b32.xlu0 %v535, 64
    %v570 = vpop.permute.xlu0 %569
    %571 = vrot.lane.b32.xlu0 %v536, 64
    %v572 = vpop.permute.xlu0 %571
    %573 = vrot.lane.b32.xlu0 %v537, 64
    %v574 = vpop.permute.xlu0 %573
    %575 = vrot.lane.b32.xlu0 %v538, 64
    %v576 = vpop.permute.xlu0 %575
    %577 = vrot.lane.b32.xlu0 %v539, 64
    %v578 = vpop.permute.xlu0 %577
    %579 = vrot.lane.b32.xlu0 %v540, 64
    %v580 = vpop.permute.xlu0 %579
    %581 = vrot.lane.b32.xlu0 %v541, 64
    %v582 = vpop.permute.xlu0 %581
    %583 = vrot.lane.b32.xlu0 %v542, 64
    %v584 = vpop.permute.xlu0 %583
    %585 = vrot.lane.b32.xlu0 %v543, 64
    %v586 = vpop.permute.xlu0 %585
    %587 = vrot.lane.b32.xlu0 %v544, 64
    %v588 = vpop.permute.xlu0 %587
    %589 = vrot.lane.b32.xlu0 %v545, 64
    %v590 = vpop.permute.xlu0 %589
    %591 = vrot.lane.b32.xlu0 %v546, 64
    %v592 = vpop.permute.xlu0 %591
    %593 = vrot.lane.b32.xlu0 %v547, 64
    %v594 = vpop.permute.xlu0 %593
    %595 = vrot.lane.b32.xlu0 %v548, 64
    %v596 = vpop.permute.xlu0 %595
    %613 = vmatprep.subr.mxu0 0.0
    %614 = vmatpush1.msra.mxu0 %v566
    %615 = vmatprep.subr.mxu0 0.0
    %616 = vmatpush1.msra.mxu0 %v568
    %617 = vmatprep.subr.mxu0 0.0
    %618 = vmatpush1.msra.mxu0 %v570
    %619 = vmatprep.subr.mxu0 0.0
    %620 = vmatpush1.msra.mxu0 %v572
    %621 = vmatprep.subr.mxu0 0.0
    %622 = vmatpush1.msra.mxu0 %v574
    %623 = vmatprep.subr.mxu0 0.0
    %624 = vmatpush1.msra.mxu0 %v576
    %625 = vmatprep.subr.mxu0 0.0
    %626 = vmatpush1.msra.mxu0 %v578
    %627 = vmatprep.subr.mxu0 0.0
    %628 = vmatpush1.msra.mxu0 %v580
    %629 = vmatprep.subr.mxu0 0.0
    %630 = vmatpush1.msra.mxu0 %v582
    %631 = vmatprep.subr.mxu0 0.0
    %632 = vmatpush1.msra.mxu0 %v584
    %633 = vmatprep.subr.mxu0 0.0
    %634 = vmatpush1.msra.mxu0 %v586
    %635 = vmatprep.subr.mxu0 0.0
    %636 = vmatpush1.msra.mxu0 %v588
    %637 = vmatprep.subr.mxu0 0.0
    %638 = vmatpush1.msra.mxu0 %v590
    %639 = vmatprep.subr.mxu0 0.0
    %640 = vmatpush1.msra.mxu0 %v592
    %641 = vmatprep.subr.mxu0 0.0
    %642 = vmatpush1.msra.mxu0 %v594
    %643 = vmatprep.subr.mxu0 0.0
    %644 = vmatpush1.msra.mxu0 %v596
    %645 = vmatprep.subr.mxu0 0.0
    %646 = vmatpush1.msra.mxu0 0.0
    %647 = vmatprep.subr.mxu0 0.0
    %648 = vmatpush1.msra.mxu0 0.0
    %649 = vmatprep.subr.mxu0 0.0
    %650 = vmatpush1.msra.mxu0 0.0
    %651 = vmatprep.subr.mxu0 0.0
    %652 = vmatpush1.msra.mxu0 0.0
    %653 = vmatprep.subr.mxu0 0.0
    %654 = vmatpush1.msra.mxu0 0.0
    %655 = vmatprep.subr.mxu0 0.0
    %656 = vmatpush1.msra.mxu0 0.0
    %657 = vmatprep.subr.mxu0 0.0
    %658 = vmatpush1.msra.mxu0 0.0
    %659 = vmatprep.subr.mxu0 0.0
    %660 = vmatpush1.msra.mxu0 0.0
    %661 = vmatprep.subr.mxu0 0.0
    %662 = vmatpush1.msra.mxu0 0.0
    %663 = vmatprep.subr.mxu0 0.0
    %664 = vmatpush1.msra.mxu0 0.0
    %665 = vmatprep.subr.mxu0 0.0
    %666 = vmatpush1.msra.mxu0 0.0
    %667 = vmatprep.subr.mxu0 0.0
    %668 = vmatpush1.msra.mxu0 0.0
    %669 = vmatprep.subr.mxu0 0.0
    %670 = vmatpush1.msra.mxu0 0.0
    %671 = vmatprep.subr.mxu0 0.0
    %672 = vmatpush1.msra.mxu0 0.0
    %673 = vmatprep.subr.mxu0 0.0
    %674 = vmatpush1.msra.mxu0 0.0
    %675 = vmatprep.subr.mxu0 0.0
    %676 = vmatpush1.msra.mxu0 0.0
    %677 = vmatprep.mubr.f32.mxu0 0.0
    %678 = vmatmul.mubr.f32.gmra.mrb[0].mxu0 %v450
    %v679 = vpop.f32.mrb[0].mxu0
    %v680 = vadd.f32 0.0, %v679
    %v681 = vpop.f32.mrb[0].mxu0
    %682 = vmatprep.mubr.f32.mxu0 0.0
    %683 = vmatmul.mubr.f32.gmra.mrb[0].mxu0 %v452
    %v684 = vpop.f32.mrb[0].mxu0
    %v685 = vadd.f32 0.0, %v684
    %v686 = vpop.f32.mrb[0].mxu0
    %687 = vdwg.mxu0
    %688 = vmatprep.subr.mxu0 0.0
    %689 = vmatpush1.msra.mxu0 %v453
    %690 = vmatprep.subr.mxu0 0.0
    %691 = vmatpush1.msra.mxu0 %v454
    %692 = vmatprep.subr.mxu0 0.0
    %693 = vmatpush1.msra.mxu0 %v455
    %694 = vmatprep.subr.mxu0 0.0
    %695 = vmatpush1.msra.mxu0 %v456
    %696 = vmatprep.subr.mxu0 0.0
    %697 = vmatpush1.msra.mxu0 %v457
    %698 = vmatprep.subr.mxu0 0.0
    %699 = vmatpush1.msra.mxu0 %v458
    %700 = vmatprep.subr.mxu0 0.0
    %701 = vmatpush1.msra.mxu0 %v459
    %702 = vmatprep.subr.mxu0 0.0
    %703 = vmatpush1.msra.mxu0 %v460
    %704 = vmatprep.subr.mxu0 0.0
    %705 = vmatpush1.msra.mxu0 %v461
    %706 = vmatprep.subr.mxu0 0.0
    %707 = vmatpush1.msra.mxu0 %v462
    %708 = vmatprep.subr.mxu0 0.0
    %709 = vmatpush1.msra.mxu0 %v463
    %710 = vmatprep.subr.mxu0 0.0
    %711 = vmatpush1.msra.mxu0 %v464
    %712 = vmatprep.subr.mxu0 0.0
    %713 = vmatpush1.msra.mxu0 %v465
    %714 = vmatprep.subr.mxu0 0.0
    %715 = vmatpush1.msra.mxu0 %v466
    %716 = vmatprep.subr.mxu0 0.0
    %717 = vmatpush1.msra.mxu0 %v467
    %718 = vmatprep.subr.mxu0 0.0
    %719 = vmatpush1.msra.mxu0 %v468
    %720 = vmatprep.subr.mxu0 0.0
    %721 = vmatpush1.msra.mxu0 0.0
    %722 = vmatprep.subr.mxu0 0.0
    %723 = vmatpush1.msra.mxu0 0.0
    %724 = vmatprep.subr.mxu0 0.0
    %725 = vmatpush1.msra.mxu0 0.0
    %726 = vmatprep.subr.mxu0 0.0
    %727 = vmatpush1.msra.mxu0 0.0
    %728 = vmatprep.subr.mxu0 0.0
    %729 = vmatpush1.msra.mxu0 0.0
    %730 = vmatprep.subr.mxu0 0.0
    %731 = vmatpush1.msra.mxu0 0.0
    %732 = vmatprep.subr.mxu0 0.0
    %733 = vmatpush1.msra.mxu0 0.0
    %734 = vmatprep.subr.mxu0 0.0
    %735 = vmatpush1.msra.mxu0 0.0
    %736 = vmatprep.subr.mxu0 0.0
    %737 = vmatpush1.msra.mxu0 0.0
    %738 = vmatprep.subr.mxu0 0.0
    %739 = vmatpush1.msra.mxu0 0.0
    %740 = vmatprep.subr.mxu0 0.0
    %741 = vmatpush1.msra.mxu0 0.0
    %742 = vmatprep.subr.mxu0 0.0
    %743 = vmatpush1.msra.mxu0 0.0
    %744 = vmatprep.subr.mxu0 0.0
    %745 = vmatpush1.msra.mxu0 0.0
    %746 = vmatprep.subr.mxu0 0.0
    %747 = vmatpush1.msra.mxu0 0.0
    %748 = vmatprep.subr.mxu0 0.0
    %749 = vmatpush1.msra.mxu0 0.0
    %750 = vmatprep.subr.mxu0 0.0
    %751 = vmatpush1.msra.mxu0 0.0
    %752 = vmatprep.mubr.f32.mxu0 0.0
    %753 = vmatmul.mubr.f32.gmra.mrb[0].mxu0 %v450
    %v754 = vpop.f32.mrb[0].mxu0
    %v755 = vadd.f32 0.0, %v754
    %v756 = vpop.f32.mrb[0].mxu0
    %757 = vmatprep.mubr.f32.mxu0 0.0
    %758 = vmatmul.mubr.f32.gmra.mrb[0].mxu0 %v452
    %v759 = vpop.f32.mrb[0].mxu0
    %v760 = vadd.f32 0.0, %v759
    %v761 = vpop.f32.mrb[0].mxu0
    %762 = vdwg.mxu0
    %v763 = vrcp.pop %v755
    %v764 = vmul.f32 %v680, %v763
    %v765 = vrcp.pop %v760
    %v766 = vmul.f32 %v685, %v765
    %v767 = vld [vmem:[#allocation9] sm:$0xff]
    %v768 = vld [vmem:[#allocation9 + $0x8] sm:$0xff]
    %v769 = vld [vmem:[#allocation9 + $0x10] sm:$0xff]
    %v770 = vld [vmem:[#allocation9 + $0x18] sm:$0xff]
    %v771 = vld [vmem:[%s7] sm:$0x1]
    %v773 = vlaneseq
    %v774 = vshrl.u32 %v773, 7
    %v775 = vsub.s32 0, %v774
    %v776 = vrot.slane %v771, %v775
    %v779 = vsel %vm110, %v764, 0
    %v782 = vsel %vm110, %v766, 0
    %784 = vmatprep.subr.mxu0 0.0
    %785 = vmatpush1.msra.mxu0 %v767
    %786 = vmatprep.subr.mxu0 0.0
    %787 = vmatpush1.msra.mxu0 %v768
    %788 = vmatprep.subr.mxu0 0.0
    %789 = vmatpush1.msra.mxu0 %v769
    %790 = vmatprep.subr.mxu0 0.0
    %791 = vmatpush1.msra.mxu0 %v770
    %792 = vmatprep.subr.mxu0 0.0
    %793 = vmatpush1.msra.mxu0 0.0
    %794 = vmatprep.subr.mxu0 0.0
    %795 = vmatpush1.msra.mxu0 0.0
    %796 = vmatprep.subr.mxu0 0.0
    %797 = vmatpush1.msra.mxu0 0.0
    %798 = vmatprep.subr.mxu0 0.0
    %799 = vmatpush1.msra.mxu0 0.0
    %800 = vmatprep.subr.mxu0 0.0
    %801 = vmatpush1.msra.mxu0 0.0
    %802 = vmatprep.subr.mxu0 0.0
    %803 = vmatpush1.msra.mxu0 0.0
    %804 = vmatprep.subr.mxu0 0.0
    %805 = vmatpush1.msra.mxu0 0.0
    %806 = vmatprep.subr.mxu0 0.0
    %807 = vmatpush1.msra.mxu0 0.0
    %808 = vmatprep.subr.mxu0 0.0
    %809 = vmatpush1.msra.mxu0 0.0
    %810 = vmatprep.subr.mxu0 0.0
    %811 = vmatpush1.msra.mxu0 0.0
    %812 = vmatprep.subr.mxu0 0.0
    %813 = vmatpush1.msra.mxu0 0.0
    %814 = vmatprep.subr.mxu0 0.0
    %815 = vmatpush1.msra.mxu0 0.0
    %816 = vmatprep.subr.mxu0 0.0
    %817 = vmatpush1.msra.mxu0 0.0
    %818 = vmatprep.subr.mxu0 0.0
    %819 = vmatpush1.msra.mxu0 0.0
    %820 = vmatprep.subr.mxu0 0.0
    %821 = vmatpush1.msra.mxu0 0.0
    %822 = vmatprep.subr.mxu0 0.0
    %823 = vmatpush1.msra.mxu0 0.0
    %824 = vmatprep.subr.mxu0 0.0
    %825 = vmatpush1.msra.mxu0 0.0
    %826 = vmatprep.subr.mxu0 0.0
    %827 = vmatpush1.msra.mxu0 0.0
    %828 = vmatprep.subr.mxu0 0.0
    %829 = vmatpush1.msra.mxu0 0.0
    %830 = vmatprep.subr.mxu0 0.0
    %831 = vmatpush1.msra.mxu0 0.0
    %832 = vmatprep.subr.mxu0 0.0
    %833 = vmatpush1.msra.mxu0 0.0
    %834 = vmatprep.subr.mxu0 0.0
    %835 = vmatpush1.msra.mxu0 0.0
    %836 = vmatprep.subr.mxu0 0.0
    %837 = vmatpush1.msra.mxu0 0.0
    %838 = vmatprep.subr.mxu0 0.0
    %839 = vmatpush1.msra.mxu0 0.0
    %840 = vmatprep.subr.mxu0 0.0
    %841 = vmatpush1.msra.mxu0 0.0
    %842 = vmatprep.subr.mxu0 0.0
    %843 = vmatpush1.msra.mxu0 0.0
    %844 = vmatprep.subr.mxu0 0.0
    %845 = vmatpush1.msra.mxu0 0.0
    %846 = vmatprep.subr.mxu0 0.0
    %847 = vmatpush1.msra.mxu0 0.0
    %848 = vmatprep.mubr.f32.mxu0 0.0
    %849 = vmatmul.mubr.f32.gmra.mrb[0].mxu0 %v779
    %v850 = vpop.f32.mrb[0].mxu0
    %v851 = vadd.f32 %v776, %v850
    %v852 = vpop.f32.mrb[0].mxu0
    %853 = vmatprep.mubr.f32.mxu0 0.0
    %854 = vmatmul.mubr.f32.gmra.mrb[0].mxu0 %v782
    %v855 = vpop.f32.mrb[0].mxu0
    %v856 = vadd.f32 %v776, %v855
    %v857 = vpop.f32.mrb[0].mxu0
    %858 = vdwg.mxu0
    %859 = vst [vmem:[%s8] sm:$0xff] %v851
    %860 = vst [vmem:[%s8 + $0x8] sm:$0xff] %v856
    // Predicated region
    $region54: #{multi_attention.1} parent=1 // pred_check
      _
    $region55: #{multi_attention.1} parent=1 // pred_check_branch
      %862 = sbr.rel (0) target = $region57
    $region56: #{multi_attention.1} parent=1 // pred_region
      _
    $region57: #{multi_attention.1} parent=1 // pred_fallthru
      _
    // Predicated region
    $region58: #{multi_attention.1} parent=1 // pred_check
      _
    $region59: #{multi_attention.1} parent=1 // pred_check_branch
      %864 = sbr.rel (0) target = $region61
    $region60: #{multi_attention.1} parent=1 // pred_region
      _
    $region61: #{multi_attention.1} parent=1 // pred_fallthru
      _
    %865 = vsyncpa [#allocation3], 1
    %866 = vsyncpa [#allocation5], 1
    %867 = vsyncpa [#allocation8], 1

</llo_original>
